<compile_context>
chip_gen: v7x
topology: tpu7x:2x2x1
jax: 0.10.0
libtpu: 0.0.40
codegen_flags: <defaults>
</compile_context>

<pallas_src>
import functools
import math

import jax
import jax.numpy as jnp
from jax import lax
from jax.experimental import pallas as pl
from jax.experimental.pallas import tpu as pltpu


def _round_up(x, m):
    return ((x + m - 1) // m) * m


def _fused_mlp_kernel(*refs, num_layers, lane_dense_out):
    """refs = (x_ref, w0, b0, w1, b1, ..., w_{L-1}, b_{L-1}, o_ref).

    Hidden layers (all but last): h = relu(h @ W + b) with f32 MXU
    accumulation, then cast back to the streaming dtype (bf16) for the next
    MXU pass. Last layer: plain Linear. If lane_dense_out, the last weight
    arrives in PyTorch (out, in) layout and the result is produced directly as
    (d_out, TILE_M) — batch on the 128-lane axis — so stores are lane-dense.
    """
    x_ref = refs[0]
    o_ref = refs[1 + 2 * num_layers]

    h = x_ref[...]
    for l in range(num_layers - 1):
        w = refs[1 + 2 * l][...]
        b = refs[2 + 2 * l][...]              # (1, D_l) f32: broadcasts over rows
        a = jnp.dot(h, w, preferred_element_type=jnp.float32) + b
        a = jnp.maximum(a, 0.0)               # ReLU on the f32 accumulator (VPU)
        h = a.astype(w.dtype)                 # back to bf16 for the next MXU pass

    w = refs[1 + 2 * (num_layers - 1)][...]
    b = refs[2 + 2 * (num_layers - 1)][...]
    if lane_dense_out:
        # (d_out, D_last) x (TILE_M, D_last) contracted on D_last -> (d_out, TILE_M)
        y = lax.dot_general(w, h, (((1,), (1,)), ((), ())),
                            preferred_element_type=jnp.float32)
        y = y + b                             # b is (d_out, 1)
    else:
        y = jnp.dot(h, w, preferred_element_type=jnp.float32) + b
    o_ref[...] = y.astype(o_ref.dtype)


def mllinear_forward(params, inputs, *, tile_m=16384, compute_dtype=jnp.bfloat16):
    """Reproduces MLLinear.forward with one fused, batch-tiled Pallas kernel.

    params: list of (W, b); W stored (in, out), b stored (1, out), float32.
    inputs: (B, linear_size[0]) float32.
    """
    B, d_in = inputs.shape
    num_layers = len(params)
    d_out = params[-1][0].shape[1]
    lane_dense = d_out < 128
    out_dtype = inputs.dtype

    # Batch tile: multiple of 128 (lane-dense output + aligned sublanes).
    # Adaptive cap: at least 2 grid steps whenever B > 128 (v7x megacore),
    # up to tile_m rows per step for large B (amortises per-step overhead).
    tile_cap = _round_up(max(int(tile_m), 128), 128)
    tile = max(128, min(tile_cap, _round_up(pl.cdiv(B, 2), 128)))
    grid = (pl.cdiv(B, tile),)

    # Stream activations / weights as bf16; accumulate in f32 inside the kernel.
    x = inputs.astype(compute_dtype)

    # If profiling ever shows exposed DMA at these tile sizes, deepen the x
    # pipeline with pipeline_mode=pl.Buffered(3) on this spec.
    in_specs = [pl.BlockSpec((tile, d_in), lambda i: (i, 0))]
    args = [x]
    for li, (w, b) in enumerate(params):
        w = w.astype(compute_dtype)
        b = b.astype(jnp.float32)             # bias-add stays on the f32 accumulator
        if lane_dense and li == num_layers - 1:
            w = w.T                           # (d_out, D_last): PyTorch layout for NT matmul
            b = b.reshape(d_out, 1)
        args.append(w)
        args.append(b)
        # Whole (tiny) weight/bias arrays; constant index_map -> VMEM-resident,
        # never re-DMA'd across grid steps.
        in_specs.append(pl.BlockSpec(w.shape, lambda i: (0, 0)))
        in_specs.append(pl.BlockSpec(b.shape, lambda i: (0, 0)))

    if lane_dense:
        b_out = _round_up(B, 128)             # lane-dense slab, padded to 128 lanes only
        out_shape = jax.ShapeDtypeStruct((d_out, b_out), out_dtype)
        out_specs = pl.BlockSpec((d_out, tile), lambda i: (0, i))
    else:
        out_shape = jax.ShapeDtypeStruct((B, d_out), out_dtype)
        out_specs = pl.BlockSpec((tile, d_out), lambda i: (i, 0))

    flops = 2 * B * sum(int(w.shape[0]) * int(w.shape[1]) for w, _ in params)
    bytes_accessed = (
        B * d_in * jnp.dtype(compute_dtype).itemsize
        + sum(int(w.size) * jnp.dtype(compute_dtype).itemsize + int(b.size) * 4
              for w, b in params)
        + B * d_out * jnp.dtype(out_dtype).itemsize)

    kernel = functools.partial(_fused_mlp_kernel, num_layers=num_layers,
                               lane_dense_out=lane_dense)
    out = pl.pallas_call(
        kernel,
        out_shape=out_shape,
        grid=grid,
        in_specs=in_specs,
        out_specs=out_specs,
        compiler_params=pltpu.CompilerParams(
            # Independent batch tiles: lets v7x shard them across its 2 TCs.
            dimension_semantics=("parallel",),
            # Headroom for the bigger tiles; <= physical VMEM on v5e/v6e/v7x.
            vmem_limit_bytes=32 * 1024 * 1024,
        ),
        cost_estimate=pl.CostEstimate(flops=flops, transcendentals=0,
                                      bytes_accessed=bytes_accessed),
    )(*args)

    if lane_dense:
        out = out[:, :B]
        if d_out == 1:
            # torch.squeeze(..., -1) on a (B, 1) result -> (B,)
            return out.reshape(B)
        return out.T
    return out


def xavier_uniform(key, fan_in, fan_out, dtype=jnp.float32):
    # matches torch.nn.init.xavier_uniform_ (gain=1.0)
    limit = math.sqrt(6.0 / (fan_in + fan_out))
    return jax.random.uniform(key, (fan_in, fan_out), dtype, -limit, limit)


def init_mllinear_params(key, linear_size, output_size, dtype=jnp.float32):
    """Returns list of (W, b) for hidden layers plus the output layer."""
    params = []
    sizes = list(zip(linear_size[:-1], linear_size[1:])) + [(linear_size[-1], output_size)]
    for (in_s, out_s) in sizes:
        key, wk, bk = jax.random.split(key, 3)
        w = xavier_uniform(wk, in_s, out_s, dtype)  # stored as (in, out)
        # PyTorch default bias init: U(-1/sqrt(fan_in), 1/sqrt(fan_in))
        bound = 1.0 / math.sqrt(in_s)
        b = jax.random.uniform(bk, (1, out_s), dtype, -bound, bound)
        params.append((w, b))
    return params


def _ref_forward(params, x, compute_dtype=jnp.bfloat16):
    """Pure-JAX reference mirroring the kernel's dtype handling exactly."""
    h = x.astype(compute_dtype)
    for (w, b) in params[:-1]:
        a = jnp.dot(h, w.astype(compute_dtype),
                    preferred_element_type=jnp.float32) + b.astype(jnp.float32)
        a = jnp.maximum(a, 0.0)
        h = a.astype(compute_dtype)
    w, b = params[-1]
    y = jnp.dot(h, w.astype(compute_dtype),
                preferred_element_type=jnp.float32) + b.astype(jnp.float32)
    if y.shape[-1] == 1:
        y = jnp.squeeze(y, axis=-1)
    return y


def _ref_forward_f32(params, x):
    """Exact float32 reference of the original PyTorch module."""
    h = x
    for (w, b) in params[:-1]:
        h = jnp.maximum(h @ w + b, 0.0)
    y = h @ params[-1][0] + params[-1][1]
    if y.shape[-1] == 1:
        y = jnp.squeeze(y, axis=-1)
    return y


if __name__ == "__main__":
    key = jax.random.PRNGKey(0)
    k_in1, k_p1, k_in2, k_p3, k_in3 = jax.random.split(key, 5)

    linear_size = [32, 64, 16]
    fwd = jax.jit(mllinear_forward, static_argnames=("tile_m", "compute_dtype"))

    # Case 1: output_size == 1 (squeeze to (B,)), tiny batch -> single ragged block.
    params1 = init_mllinear_params(k_p1, linear_size, 1)
    x1 = jax.random.normal(k_in1, (8, linear_size[0]), jnp.float32)
    out1 = fwd(params1, x1)
    jax.block_until_ready(out1)
    ref1 = _ref_forward(params1, x1)
    assert out1.shape == (8,), out1.shape
    assert jnp.allclose(out1, ref1, atol=2e-3), "mismatch vs reference (case 1)"

    # Case 2: ragged multi-step grid (B=300 -> tile=256, 2 steps, last block ragged),
    # no jnp.pad of x anywhere.
    x2 = jax.random.normal(k_in2, (300, linear_size[0]), jnp.float32)
    out2 = fwd(params1, x2)
    jax.block_until_ready(out2)
    ref2 = _ref_forward(params1, x2)
    assert out2.shape == (300,), out2.shape
    assert jnp.allclose(out2, ref2, atol=2e-3), "mismatch vs reference (case 2)"
    # Loose sanity check of the bf16-streamed kernel against exact f32 math.
    ref2_f32 = _ref_forward_f32(params1, x2)
    assert jnp.allclose(out2, ref2_f32, atol=8e-2), "bf16 drift too large vs f32 ref"

    # Case 3: d_out = 4 (< 128): generalized lane-dense (d_out, B) slab path, no squeeze.
    params3 = init_mllinear_params(k_p3, linear_size, 4)
    x3 = jax.random.normal(k_in3, (200, linear_size[0]), jnp.float32)
    out3 = fwd(params3, x3)
    jax.block_until_ready(out3)
    ref3 = _ref_forward(params3, x3)
    assert out3.shape == (200, 4), out3.shape
    assert jnp.allclose(out3, ref3, atol=2e-3), "mismatch vs reference (case 3)"

    print("KERNEL_OK")
</pallas_src>

<mosaic_0001>
module attributes {stable_mosaic.version = 11 : i64} {
  func.func @_fused_mlp_kernel(%arg0: i32, %arg1: memref<128x32xbf16, #tpu.memory_space<vmem>>, %arg2: memref<32x64xbf16, #tpu.memory_space<vmem>>, %arg3: memref<1x64xf32, #tpu.memory_space<vmem>>, %arg4: memref<64x16xbf16, #tpu.memory_space<vmem>>, %arg5: memref<1x16xf32, #tpu.memory_space<vmem>>, %arg6: memref<1x16xbf16, #tpu.memory_space<vmem>>, %arg7: memref<1x1xf32, #tpu.memory_space<vmem>>, %arg8: memref<1x128xf32, #tpu.memory_space<vmem>>) attributes {dimension_semantics = [#tpu.dimension_semantics<parallel>], iteration_bounds = array<i64: 1>, scalar_prefetch = 0 : i64, scratch_operands = 0 : i64, tpu.core_type = #tpu.core_type<tc>, window_params = [{transform_indices = @transform_0, window_bounds = array<i64: 128, 32>}, {pipeline_mode = #tpu.pipeline_mode<synchronous>, transform_indices = @transform_1, window_bounds = array<i64: 32, 64>}, {pipeline_mode = #tpu.pipeline_mode<synchronous>, transform_indices = @transform_2, window_bounds = array<i64: 1, 64>}, {pipeline_mode = #tpu.pipeline_mode<synchronous>, transform_indices = @transform_3, window_bounds = array<i64: 64, 16>}, {pipeline_mode = #tpu.pipeline_mode<synchronous>, transform_indices = @transform_4, window_bounds = array<i64: 1, 16>}, {pipeline_mode = #tpu.pipeline_mode<synchronous>, transform_indices = @transform_5, window_bounds = array<i64: 1, 16>}, {pipeline_mode = #tpu.pipeline_mode<synchronous>, transform_indices = @transform_6, window_bounds = array<i64: 1, 1>}, {transform_indices = @transform_7, window_bounds = array<i64: 1, 128>}]} {
    %c0 = arith.constant 0 : index
    %c0_0 = arith.constant 0 : index
    %0 = vector.load %arg1[%c0, %c0_0] : memref<128x32xbf16, #tpu.memory_space<vmem>>, vector<128x32xbf16>
    %c0_1 = arith.constant 0 : index
    %c0_2 = arith.constant 0 : index
    %1 = vector.load %arg2[%c0_1, %c0_2] : memref<32x64xbf16, #tpu.memory_space<vmem>>, vector<32x64xbf16>
    %c0_3 = arith.constant 0 : index
    %c0_4 = arith.constant 0 : index
    %2 = vector.load %arg3[%c0_3, %c0_4] : memref<1x64xf32, #tpu.memory_space<vmem>>, vector<1x64xf32>
    %cst = arith.constant dense<0.000000e+00> : vector<128x64xf32>
    %3 = tpu.matmul %0, %1, %cst {dimension_numbers = #tpu.dot_dimension_numbers<[1], [0], [0], [1], [0, 0, 1, 1], [], []>} : vector<128x32xbf16>, vector<32x64xbf16>, vector<128x64xf32> -> vector<128x64xf32>
    %4 = vector.broadcast %2 : vector<1x64xf32> to vector<128x64xf32>
    %5 = arith.addf %3, %4 : vector<128x64xf32>
    %cst_5 = arith.constant 0.000000e+00 : f32
    %6 = vector.broadcast %cst_5 : f32 to vector<128x64xf32>
    %7 = arith.maximumf %5, %6 : vector<128x64xf32>
    %8 = arith.truncf %7 : vector<128x64xf32> to vector<128x64xbf16>
    %c0_6 = arith.constant 0 : index
    %c0_7 = arith.constant 0 : index
    %9 = vector.load %arg4[%c0_6, %c0_7] : memref<64x16xbf16, #tpu.memory_space<vmem>>, vector<64x16xbf16>
    %c0_8 = arith.constant 0 : index
    %c0_9 = arith.constant 0 : index
    %10 = vector.load %arg5[%c0_8, %c0_9] : memref<1x16xf32, #tpu.memory_space<vmem>>, vector<1x16xf32>
    %cst_10 = arith.constant dense<0.000000e+00> : vector<128x16xf32>
    %11 = tpu.matmul %8, %9, %cst_10 {dimension_numbers = #tpu.dot_dimension_numbers<[1], [0], [0], [1], [0, 0, 1, 1], [], []>} : vector<128x64xbf16>, vector<64x16xbf16>, vector<128x16xf32> -> vector<128x16xf32>
    %12 = vector.broadcast %10 : vector<1x16xf32> to vector<128x16xf32>
    %13 = arith.addf %11, %12 : vector<128x16xf32>
    %cst_11 = arith.constant 0.000000e+00 : f32
    %14 = vector.broadcast %cst_11 : f32 to vector<128x16xf32>
    %15 = arith.maximumf %13, %14 : vector<128x16xf32>
    %16 = arith.truncf %15 : vector<128x16xf32> to vector<128x16xbf16>
    %c0_12 = arith.constant 0 : index
    %c0_13 = arith.constant 0 : index
    %17 = vector.load %arg6[%c0_12, %c0_13] : memref<1x16xbf16, #tpu.memory_space<vmem>>, vector<1x16xbf16>
    %c0_14 = arith.constant 0 : index
    %c0_15 = arith.constant 0 : index
    %18 = vector.load %arg7[%c0_14, %c0_15] : memref<1x1xf32, #tpu.memory_space<vmem>>, vector<1x1xf32>
    %cst_16 = arith.constant dense<0.000000e+00> : vector<1x128xf32>
    %19 = tpu.matmul %17, %16, %cst_16 {dimension_numbers = #tpu.dot_dimension_numbers<[1], [1], [0], [0], [0, 0, 1, 0], [], []>} : vector<1x16xbf16>, vector<128x16xbf16>, vector<1x128xf32> -> vector<1x128xf32>
    %20 = vector.broadcast %18 : vector<1x1xf32> to vector<1x128xf32>
    %21 = arith.addf %19, %20 : vector<1x128xf32>
    %c0_17 = arith.constant 0 : index
    %c0_18 = arith.constant 0 : index
    %22 = vector.load %arg8[%c0_17, %c0_18] : memref<1x128xf32, #tpu.memory_space<vmem>>, vector<1x128xf32>
    tpu.vector_store %arg8[%c0_17, %c0_18], %21 {strides = array<i32>} : memref<1x128xf32, #tpu.memory_space<vmem>>, vector<1x128xf32>,
    return
  }
  func.func @transform_0(%arg0: i32) -> (i32, i32) {
    %c0_i32 = arith.constant 0 : i32
    %c0_i32_0 = arith.constant 0 : i32
    return %arg0, %c0_i32 : i32, i32
  }
  func.func @transform_1(%arg0: i32) -> (i32, i32) {
    %c0_i32 = arith.constant 0 : i32
    %c0_i32_0 = arith.constant 0 : i32
    %c0_i32_1 = arith.constant 0 : i32
    return %c0_i32, %c0_i32_0 : i32, i32
  }
  func.func @transform_2(%arg0: i32) -> (i32, i32) {
    %c0_i32 = arith.constant 0 : i32
    %c0_i32_0 = arith.constant 0 : i32
    %c0_i32_1 = arith.constant 0 : i32
    return %c0_i32, %c0_i32_0 : i32, i32
  }
  func.func @transform_3(%arg0: i32) -> (i32, i32) {
    %c0_i32 = arith.constant 0 : i32
    %c0_i32_0 = arith.constant 0 : i32
    %c0_i32_1 = arith.constant 0 : i32
    return %c0_i32, %c0_i32_0 : i32, i32
  }
  func.func @transform_4(%arg0: i32) -> (i32, i32) {
    %c0_i32 = arith.constant 0 : i32
    %c0_i32_0 = arith.constant 0 : i32
    %c0_i32_1 = arith.constant 0 : i32
    return %c0_i32, %c0_i32_0 : i32, i32
  }
  func.func @transform_5(%arg0: i32) -> (i32, i32) {
    %c0_i32 = arith.constant 0 : i32
    %c0_i32_0 = arith.constant 0 : i32
    %c0_i32_1 = arith.constant 0 : i32
    return %c0_i32, %c0_i32_0 : i32, i32
  }
  func.func @transform_6(%arg0: i32) -> (i32, i32) {
    %c0_i32 = arith.constant 0 : i32
    %c0_i32_0 = arith.constant 0 : i32
    %c0_i32_1 = arith.constant 0 : i32
    return %c0_i32, %c0_i32_0 : i32, i32
  }
  func.func @transform_7(%arg0: i32) -> (i32, i32) {
    %c0_i32 = arith.constant 0 : i32
    %c0_i32_0 = arith.constant 0 : i32
    return %c0_i32, %arg0 : i32, i32
  }
}

</mosaic_0001>

<llo_original>
// kernel: mllinear_forward.1
$region0: #{mllinear_forward.1}
  #allocation0 [shape = 'u32[]', space=smem, size = 0x4, offset = 0x4, fixed_abs, tag = 'smem constant byte address 0x4 - core index']
  #allocation1 [shape = 'u32[144,128]{1,0:T(1,128)}', space=vmem, size = 0x12000, scoped, tag = 'internal scratch']
  #allocation2 [shape = 'f32[1,1]{1,0:T(1,128)S(1)}', space=vmem, size = 0x200, scoped, tag = 'scoped memory for mllinear_forward.1']
  %s0 = inlined_call_operand.vmem [shape: bf16[8,32], index: 0, kind: input, shape index: {}]
  %s1 = inlined_call_operand.vmem [shape: bf16[32,64], index: 1, kind: input, shape index: {}]
  %s2 = inlined_call_operand.vmem [shape: f32[1,64], index: 2, kind: input, shape index: {}]
  %s3 = inlined_call_operand.vmem [shape: bf16[64,16], index: 3, kind: input, shape index: {}]
  %s4 = inlined_call_operand.vmem [shape: f32[1,16], index: 4, kind: input, shape index: {}]
  %s5 = inlined_call_operand.vmem [shape: bf16[1,16], index: 5, kind: input, shape index: {}]
  %s6 = inlined_call_operand.<no memory space> [shape: f32[1,1], index: 6, kind: input, shape index: {}]
  %s7 = inlined_call_operand.vmem [shape: f32[1,128], index: 7, kind: output, shape index: {}]
  %s8 = sld [smem:[#allocation0]]
  $region38: #{mllinear_forward.1} parent=0
    _
  %s10 = ssub.s32 1, %s8
  %s11 = scalar_select 0, %s10, %s8
  %v12 = vstv %s6
  %13 = vst [vmem:[#allocation2] sm:$0x1] %v12
  // Predicated region
  $region2: #{mllinear_forward.1} parent=0 // pred_check
    _
  $region3: #{mllinear_forward.1} parent=0 // pred_check_branch
    %15 = sbr.rel (0) target = $region5
  $region4: #{mllinear_forward.1} parent=0 // pred_region
    _
  $region5: #{mllinear_forward.1} parent=0 // pred_fallthru
    _
  // Predicated region
  $region6: #{mllinear_forward.1} parent=0 // pred_check
    _
  $region7: #{mllinear_forward.1} parent=0 // pred_check_branch
    %17 = sbr.rel (0) target = $region9
  $region8: #{mllinear_forward.1} parent=0 // pred_region
    _
  $region9: #{mllinear_forward.1} parent=0 // pred_fallthru
    _
  // Predicated region
  $region10: #{mllinear_forward.1} parent=0 // pred_check
    _
  $region11: #{mllinear_forward.1} parent=0 // pred_check_branch
    %19 = sbr.rel (0) target = $region13
  $region12: #{mllinear_forward.1} parent=0 // pred_region
    _
  $region13: #{mllinear_forward.1} parent=0 // pred_fallthru
    _
  // Predicated region
  $region14: #{mllinear_forward.1} parent=0 // pred_check
    _
  $region15: #{mllinear_forward.1} parent=0 // pred_check_branch
    %21 = sbr.rel (0) target = $region17
  $region16: #{mllinear_forward.1} parent=0 // pred_region
    _
  $region17: #{mllinear_forward.1} parent=0 // pred_fallthru
    _
  // Predicated region
  $region18: #{mllinear_forward.1} parent=0 // pred_check
    _
  $region19: #{mllinear_forward.1} parent=0 // pred_check_branch
    %23 = sbr.rel (0) target = $region21
  $region20: #{mllinear_forward.1} parent=0 // pred_region
    _
  $region21: #{mllinear_forward.1} parent=0 // pred_fallthru
    _
  // Predicated region
  $region22: #{mllinear_forward.1} parent=0 // pred_check
    _
  $region23: #{mllinear_forward.1} parent=0 // pred_check_branch
    %25 = sbr.rel (0) target = $region25
  $region24: #{mllinear_forward.1} parent=0 // pred_region
    _
  $region25: #{mllinear_forward.1} parent=0 // pred_fallthru
    _
  // Predicated region
  $region26: #{mllinear_forward.1} parent=0 // pred_check
    _
  $region27: #{mllinear_forward.1} parent=0 // pred_check_branch
    %27 = sbr.rel (0) target = $region29
  $region28: #{mllinear_forward.1} parent=0 // pred_region
    _
  $region29: #{mllinear_forward.1} parent=0 // pred_fallthru
    _
  %v29 = vld [vmem:[%s0] sm:$0xf]
  %v30 = vld [vmem:[%s0 + $0x4] sm:$0xf]
  %v31 = vld [vmem:[%s0 + $0x8] sm:$0xf]
  %v32 = vld [vmem:[%s0 + $0xc] sm:$0xf]
  %v33 = vld [vmem:[%s0 + $0x10] sm:$0xf]
  %v34 = vld [vmem:[%s0 + $0x14] sm:$0xf]
  %v35 = vld [vmem:[%s0 + $0x18] sm:$0xf]
  %v36 = vld [vmem:[%s0 + $0x1c] sm:$0xf]
  %v37 = vld [vmem:[%s0 + $0x20] sm:$0xf]
  %v38 = vld [vmem:[%s0 + $0x24] sm:$0xf]
  %v39 = vld [vmem:[%s0 + $0x28] sm:$0xf]
  %v40 = vld [vmem:[%s0 + $0x2c] sm:$0xf]
  %v41 = vld [vmem:[%s0 + $0x30] sm:$0xf]
  %v42 = vld [vmem:[%s0 + $0x34] sm:$0xf]
  %v43 = vld [vmem:[%s0 + $0x38] sm:$0xf]
  %v44 = vld [vmem:[%s0 + $0x3c] sm:$0xf]
  %v45 = vld [vmem:[%s1] sm:$0xf]
  %v46 = vld [vmem:[%s1 + $0x4] sm:$0xf]
  %v47 = vld [vmem:[%s1 + $0x8] sm:$0xf]
  %v48 = vld [vmem:[%s1 + $0xc] sm:$0xf]
  %v49 = vld [vmem:[%s2] sm:$0x1]
  %v51 = vlaneseq
  %v52 = vshrl.u32 %v51, 7
  %v53 = vsub.s32 0, %v52
  %v54 = vrot.slane %v49, %v53
  %v72 = vunpack.c.l.b16 %v29
  %v73 = vunpack.c.l.b16 %v30
  %v74 = vunpack.c.l.b16 %v31
  %v75 = vunpack.c.l.b16 %v32
  %v76 = vunpack.c.l.b16 %v33
  %v77 = vunpack.c.l.b16 %v34
  %v78 = vunpack.c.l.b16 %v35
  %v79 = vunpack.c.l.b16 %v36
  %v80 = vunpack.c.l.b16 %v37
  %v81 = vunpack.c.l.b16 %v38
  %v82 = vunpack.c.l.b16 %v39
  %v83 = vunpack.c.l.b16 %v40
  %v84 = vunpack.c.l.b16 %v41
  %v85 = vunpack.c.l.b16 %v42
  %v86 = vunpack.c.l.b16 %v43
  %v87 = vunpack.c.l.b16 %v44
  %v88 = vpack.c.b16 %v73, %v72
  %v89 = vpack.c.b16 %v75, %v74
  %v90 = vpack.c.b16 %v77, %v76
  %v91 = vpack.c.b16 %v79, %v78
  %v92 = vpack.c.b16 %v81, %v80
  %v93 = vpack.c.b16 %v83, %v82
  %v94 = vpack.c.b16 %v85, %v84
  %v95 = vpack.c.b16 %v87, %v86
  %v100 = vunpack.c.l.b16 %v45
  %v101 = vunpack.c.l.b16 %v46
  %v102 = vunpack.c.l.b16 %v47
  %v103 = vunpack.c.l.b16 %v48
  %v104 = vpack.c.b16 %v101, %v100
  %v105 = vpack.c.b16 %v103, %v102
  %vm108 = vcmask 261120
  %v110 = vsel %vm108, %v88, 0
  %v113 = vsel %vm108, %v89, 0
  %v116 = vsel %vm108, %v90, 0
  %v119 = vsel %vm108, %v91, 0
  %v122 = vsel %vm108, %v92, 0
  %v125 = vsel %vm108, %v93, 0
  %v128 = vsel %vm108, %v94, 0
  %v131 = vsel %vm108, %v95, 0
  %133 = vmatprep.subr.bf16.mxu0 0
  %134 = vmatpush1.bf16.msra.mxu0 %v104
  %135 = vmatprep.subr.bf16.mxu0 0
  %136 = vmatpush1.bf16.msra.mxu0 %v105
  %137 = vmatprep.subr.bf16.mxu0 0
  %138 = vmatpush1.bf16.msra.mxu0 0
  %139 = vmatprep.subr.bf16.mxu0 0
  %140 = vmatpush1.bf16.msra.mxu0 0
  %141 = vmatprep.subr.bf16.mxu0 0
  %142 = vmatpush1.bf16.msra.mxu0 0
  %143 = vmatprep.subr.bf16.mxu0 0
  %144 = vmatpush1.bf16.msra.mxu0 0
  %145 = vmatprep.subr.bf16.mxu0 0
  %146 = vmatpush1.bf16.msra.mxu0 0
  %147 = vmatprep.subr.bf16.mxu0 0
  %148 = vmatpush1.bf16.msra.mxu0 0
  %149 = vmatprep.subr.bf16.mxu0 0
  %150 = vmatpush1.bf16.msra.mxu0 0
  %151 = vmatprep.subr.bf16.mxu0 0
  %152 = vmatpush1.bf16.msra.mxu0 0
  %153 = vmatprep.subr.bf16.mxu0 0
  %154 = vmatpush1.bf16.msra.mxu0 0
  %155 = vmatprep.subr.bf16.mxu0 0
  %156 = vmatpush1.bf16.msra.mxu0 0
  %157 = vmatprep.subr.bf16.mxu0 0
  %158 = vmatpush1.bf16.msra.mxu0 0
  %159 = vmatprep.subr.bf16.mxu0 0
  %160 = vmatpush1.bf16.msra.mxu0 0
  %161 = vmatprep.subr.bf16.mxu0 0
  %162 = vmatpush1.bf16.msra.mxu0 0
  %163 = vmatprep.subr.bf16.mxu0 0
  %164 = vmatpush1.bf16.msra.mxu0 0
  %165 = vmatprep.mubr.bf16.mxu0 0
  %166 = vmatmul.mubr.bf16.gmra.mrb[0].mxu0 %v110
  %v167 = vpop.f32.mrb[0].mxu0
  %v168 = vadd.f32 %v54, %v167
  %v169 = vpop.f32.mrb[0].mxu0
  %v170 = vpop.f32.mrb[0].mxu0
  %v171 = vadd.f32 %v54, %v170
  %v172 = vpop.f32.mrb[0].mxu0
  %173 = vmatprep.mubr.bf16.mxu0 0
  %174 = vmatmul.mubr.bf16.gmra.mrb[0].mxu0 %v113
  %v175 = vpop.f32.mrb[0].mxu0
  %v176 = vadd.f32 %v54, %v175
  %v177 = vpop.f32.mrb[0].mxu0
  %v178 = vpop.f32.mrb[0].mxu0
  %v179 = vadd.f32 %v54, %v178
  %v180 = vpop.f32.mrb[0].mxu0
  %181 = vmatprep.mubr.bf16.mxu0 0
  %182 = vmatmul.mubr.bf16.gmra.mrb[0].mxu0 %v116
  %v183 = vpop.f32.mrb[0].mxu0
  %v184 = vadd.f32 %v54, %v183
  %v185 = vpop.f32.mrb[0].mxu0
  %v186 = vpop.f32.mrb[0].mxu0
  %v187 = vadd.f32 %v54, %v186
  %v188 = vpop.f32.mrb[0].mxu0
  %189 = vmatprep.mubr.bf16.mxu0 0
  %190 = vmatmul.mubr.bf16.gmra.mrb[0].mxu0 %v119
  %v191 = vpop.f32.mrb[0].mxu0
  %v192 = vadd.f32 %v54, %v191
  %v193 = vpop.f32.mrb[0].mxu0
  %v194 = vpop.f32.mrb[0].mxu0
  %v195 = vadd.f32 %v54, %v194
  %v196 = vpop.f32.mrb[0].mxu0
  %197 = vmatprep.mubr.bf16.mxu0 0
  %198 = vmatmul.mubr.bf16.gmra.mrb[0].mxu0 %v122
  %v199 = vpop.f32.mrb[0].mxu0
  %v200 = vadd.f32 %v54, %v199
  %v201 = vpop.f32.mrb[0].mxu0
  %v202 = vpop.f32.mrb[0].mxu0
  %v203 = vadd.f32 %v54, %v202
  %v204 = vpop.f32.mrb[0].mxu0
  %205 = vmatprep.mubr.bf16.mxu0 0
  %206 = vmatmul.mubr.bf16.gmra.mrb[0].mxu0 %v125
  %v207 = vpop.f32.mrb[0].mxu0
  %v208 = vadd.f32 %v54, %v207
  %v209 = vpop.f32.mrb[0].mxu0
  %v210 = vpop.f32.mrb[0].mxu0
  %v211 = vadd.f32 %v54, %v210
  %v212 = vpop.f32.mrb[0].mxu0
  %213 = vmatprep.mubr.bf16.mxu0 0
  %214 = vmatmul.mubr.bf16.gmra.mrb[0].mxu0 %v128
  %v215 = vpop.f32.mrb[0].mxu0
  %v216 = vadd.f32 %v54, %v215
  %v217 = vpop.f32.mrb[0].mxu0
  %v218 = vpop.f32.mrb[0].mxu0
  %v219 = vadd.f32 %v54, %v218
  %v220 = vpop.f32.mrb[0].mxu0
  %221 = vmatprep.mubr.bf16.mxu0 0
  %222 = vmatmul.mubr.bf16.gmra.mrb[0].mxu0 %v131
  %v223 = vpop.f32.mrb[0].mxu0
  %v224 = vadd.f32 %v54, %v223
  %v225 = vpop.f32.mrb[0].mxu0
  %v226 = vpop.f32.mrb[0].mxu0
  %v227 = vadd.f32 %v54, %v226
  %v228 = vpop.f32.mrb[0].mxu0
  %229 = vdwg.mxu0
  %v230 = vmax.f32 %v168, 0.0
  %v231 = vmax.f32 %v171, 0.0
  %v232 = vmax.f32 %v176, 0.0
  %v233 = vmax.f32 %v179, 0.0
  %v234 = vmax.f32 %v184, 0.0
  %v235 = vmax.f32 %v187, 0.0
  %v236 = vmax.f32 %v192, 0.0
  %v237 = vmax.f32 %v195, 0.0
  %v238 = vmax.f32 %v200, 0.0
  %v239 = vmax.f32 %v203, 0.0
  %v240 = vmax.f32 %v208, 0.0
  %v241 = vmax.f32 %v211, 0.0
  %v242 = vmax.f32 %v216, 0.0
  %v243 = vmax.f32 %v219, 0.0
  %v244 = vmax.f32 %v224, 0.0
  %v245 = vmax.f32 %v227, 0.0
  %v246 = vpack.c.bf16 %v231, %v230
  %v247 = vpack.c.bf16 %v233, %v232
  %v248 = vpack.c.bf16 %v235, %v234
  %v249 = vpack.c.bf16 %v237, %v236
  %v250 = vpack.c.bf16 %v239, %v238
  %v251 = vpack.c.bf16 %v241, %v240
  %v252 = vpack.c.bf16 %v243, %v242
  %v253 = vpack.c.bf16 %v245, %v244
  %v254 = vld [vmem:[%s3] sm:$0xf]
  %v255 = vld [vmem:[%s3 + $0x4] sm:$0xf]
  %v256 = vld [vmem:[%s3 + $0x8] sm:$0xf]
  %v257 = vld [vmem:[%s3 + $0xc] sm:$0xf]
  %v258 = vld [vmem:[%s3 + $0x10] sm:$0xf]
  %v259 = vld [vmem:[%s3 + $0x14] sm:$0xf]
  %v260 = vld [vmem:[%s3 + $0x18] sm:$0xf]
  %v261 = vld [vmem:[%s3 + $0x1c] sm:$0xf]
  %v262 = vld [vmem:[%s4] sm:$0x1]
  %v264 = vlaneseq
  %v265 = vshrl.u32 %v264, 7
  %v266 = vsub.s32 0, %v265
  %v267 = vrot.slane %v262, %v266
  %v277 = vunpack.c.l.b16 %v254
  %v278 = vunpack.c.l.b16 %v255
  %v279 = vunpack.c.l.b16 %v256
  %v280 = vunpack.c.l.b16 %v257
  %v281 = vunpack.c.l.b16 %v258
  %v282 = vunpack.c.l.b16 %v259
  %v283 = vunpack.c.l.b16 %v260
  %v284 = vunpack.c.l.b16 %v261
  %v285 = vpack.c.b16 %v278, %v277
  %v286 = vpack.c.b16 %v280, %v279
  %v287 = vpack.c.b16 %v282, %v281
  %v288 = vpack.c.b16 %v284, %v283
  %vm293 = vcmask 523264
  %v295 = vsel %vm293, %v246, 0
  %v298 = vsel %vm293, %v247, 0
  %v301 = vsel %vm293, %v248, 0
  %v304 = vsel %vm293, %v249, 0
  %v307 = vsel %vm293, %v250, 0
  %v310 = vsel %vm293, %v251, 0
  %v313 = vsel %vm293, %v252, 0
  %v316 = vsel %vm293, %v253, 0
  %318 = vmatprep.subr.bf16.mxu0 0
  %319 = vmatpush1.bf16.msra.mxu0 %v285
  %320 = vmatprep.subr.bf16.mxu0 0
  %321 = vmatpush1.bf16.msra.mxu0 %v286
  %322 = vmatprep.subr.bf16.mxu0 0
  %323 = vmatpush1.bf16.msra.mxu0 %v287
  %324 = vmatprep.subr.bf16.mxu0 0
  %325 = vmatpush1.bf16.msra.mxu0 %v288
  %326 = vmatprep.subr.bf16.mxu0 0
  %327 = vmatpush1.bf16.msra.mxu0 0
  %328 = vmatprep.subr.bf16.mxu0 0
  %329 = vmatpush1.bf16.msra.mxu0 0
  %330 = vmatprep.subr.bf16.mxu0 0
  %331 = vmatpush1.bf16.msra.mxu0 0
  %332 = vmatprep.subr.bf16.mxu0 0
  %333 = vmatpush1.bf16.msra.mxu0 0
  %334 = vmatprep.subr.bf16.mxu0 0
  %335 = vmatpush1.bf16.msra.mxu0 0
  %336 = vmatprep.subr.bf16.mxu0 0
  %337 = vmatpush1.bf16.msra.mxu0 0
  %338 = vmatprep.subr.bf16.mxu0 0
  %339 = vmatpush1.bf16.msra.mxu0 0
  %340 = vmatprep.subr.bf16.mxu0 0
  %341 = vmatpush1.bf16.msra.mxu0 0
  %342 = vmatprep.subr.bf16.mxu0 0
  %343 = vmatpush1.bf16.msra.mxu0 0
  %344 = vmatprep.subr.bf16.mxu0 0
  %345 = vmatpush1.bf16.msra.mxu0 0
  %346 = vmatprep.subr.bf16.mxu0 0
  %347 = vmatpush1.bf16.msra.mxu0 0
  %348 = vmatprep.subr.bf16.mxu0 0
  %349 = vmatpush1.bf16.msra.mxu0 0
  %350 = vmatprep.mubr.bf16.mxu0 0
  %351 = vmatmul.mubr.bf16.gmra.mrb[0].mxu0 %v295
  %v352 = vpop.f32.mrb[0].mxu0
  %v353 = vadd.f32 %v267, %v352
  %v354 = vpop.f32.mrb[0].mxu0
  %v355 = vpop.f32.mrb[0].mxu0
  %v356 = vadd.f32 %v267, %v355
  %v357 = vpop.f32.mrb[0].mxu0
  %358 = vmatprep.mubr.bf16.mxu0 0
  %359 = vmatmul.mubr.bf16.gmra.mrb[0].mxu0 %v298
  %v360 = vpop.f32.mrb[0].mxu0
  %v361 = vadd.f32 %v267, %v360
  %v362 = vpop.f32.mrb[0].mxu0
  %v363 = vpop.f32.mrb[0].mxu0
  %v364 = vadd.f32 %v267, %v363
  %v365 = vpop.f32.mrb[0].mxu0
  %366 = vmatprep.mubr.bf16.mxu0 0
  %367 = vmatmul.mubr.bf16.gmra.mrb[0].mxu0 %v301
  %v368 = vpop.f32.mrb[0].mxu0
  %v369 = vadd.f32 %v267, %v368
  %v370 = vpop.f32.mrb[0].mxu0
  %v371 = vpop.f32.mrb[0].mxu0
  %v372 = vadd.f32 %v267, %v371
  %v373 = vpop.f32.mrb[0].mxu0
  %374 = vmatprep.mubr.bf16.mxu0 0
  %375 = vmatmul.mubr.bf16.gmra.mrb[0].mxu0 %v304
  %v376 = vpop.f32.mrb[0].mxu0
  %v377 = vadd.f32 %v267, %v376
  %v378 = vpop.f32.mrb[0].mxu0
  %v379 = vpop.f32.mrb[0].mxu0
  %v380 = vadd.f32 %v267, %v379
  %v381 = vpop.f32.mrb[0].mxu0
  %382 = vmatprep.mubr.bf16.mxu0 0
  %383 = vmatmul.mubr.bf16.gmra.mrb[0].mxu0 %v307
  %v384 = vpop.f32.mrb[0].mxu0
  %v385 = vadd.f32 %v267, %v384
  %v386 = vpop.f32.mrb[0].mxu0
  %v387 = vpop.f32.mrb[0].mxu0
  %v388 = vadd.f32 %v267, %v387
  %v389 = vpop.f32.mrb[0].mxu0
  %390 = vmatprep.mubr.bf16.mxu0 0
  %391 = vmatmul.mubr.bf16.gmra.mrb[0].mxu0 %v310
  %v392 = vpop.f32.mrb[0].mxu0
  %v393 = vadd.f32 %v267, %v392
  %v394 = vpop.f32.mrb[0].mxu0
  %v395 = vpop.f32.mrb[0].mxu0
  %v396 = vadd.f32 %v267, %v395
  %v397 = vpop.f32.mrb[0].mxu0
  %398 = vmatprep.mubr.bf16.mxu0 0
  %399 = vmatmul.mubr.bf16.gmra.mrb[0].mxu0 %v313
  %v400 = vpop.f32.mrb[0].mxu0
  %v401 = vadd.f32 %v267, %v400
  %v402 = vpop.f32.mrb[0].mxu0
  %v403 = vpop.f32.mrb[0].mxu0
  %v404 = vadd.f32 %v267, %v403
  %v405 = vpop.f32.mrb[0].mxu0
  %406 = vmatprep.mubr.bf16.mxu0 0
  %407 = vmatmul.mubr.bf16.gmra.mrb[0].mxu0 %v316
  %v408 = vpop.f32.mrb[0].mxu0
  %v409 = vadd.f32 %v267, %v408
  %v410 = vpop.f32.mrb[0].mxu0
  %v411 = vpop.f32.mrb[0].mxu0
  %v412 = vadd.f32 %v267, %v411
  %v413 = vpop.f32.mrb[0].mxu0
  %414 = vdwg.mxu0
  %v415 = vmax.f32 %v353, 0.0
  %v416 = vmax.f32 %v356, 0.0
  %v417 = vmax.f32 %v361, 0.0
  %v418 = vmax.f32 %v364, 0.0
  %v419 = vmax.f32 %v369, 0.0
  %v420 = vmax.f32 %v372, 0.0
  %v421 = vmax.f32 %v377, 0.0
  %v422 = vmax.f32 %v380, 0.0
  %v423 = vmax.f32 %v385, 0.0
  %v424 = vmax.f32 %v388, 0.0
  %v425 = vmax.f32 %v393, 0.0
  %v426 = vmax.f32 %v396, 0.0
  %v427 = vmax.f32 %v401, 0.0
  %v428 = vmax.f32 %v404, 0.0
  %v429 = vmax.f32 %v409, 0.0
  %v430 = vmax.f32 %v412, 0.0
  %v431 = vpack.c.bf16 %v416, %v415
  %v432 = vpack.c.bf16 %v418, %v417
  %v433 = vpack.c.bf16 %v420, %v419
  %v434 = vpack.c.bf16 %v422, %v421
  %v435 = vpack.c.bf16 %v424, %v423
  %v436 = vpack.c.bf16 %v426, %v425
  %v437 = vpack.c.bf16 %v428, %v427
  %v438 = vpack.c.bf16 %v430, %v429
  %v439 = vld [vmem:[%s5] sm:$0x1]
  %v440 = vld [vmem:[#allocation2] sm:$0x1]
  %442 = vset.pattern.permute.xlu0 0
  %443 = vperm.xlu0 %442, %v440
  %v444 = vpop.permute.xlu0 %443
  %v446 = vlaneseq
  %v447 = vshrl.u32 %v446, 7
  %v448 = vsub.s32 0, %v447
  %v449 = vrot.slane %v444, %v448
  %vm450 = vcmask 130048
  %v452 = vsel %vm450, %v439, 0
  %v455 = vsel %vm450, %v431, 0
  %v458 = vsel %vm450, %v432, 0
  %v461 = vsel %vm450, %v433, 0
  %v464 = vsel %vm450, %v434, 0
  %v467 = vsel %vm450, %v435, 0
  %v470 = vsel %vm450, %v436, 0
  %v473 = vsel %vm450, %v437, 0
  %v476 = vsel %vm450, %v438, 0
  %478 = vmatprep.subr.bf16.mxu0 0
  %479 = vmatpush1.bf16.xpose.msra.mxu0 %v455
  %480 = vmatprep.subr.bf16.mxu0 0
  %481 = vmatpush1.bf16.xpose.msra.mxu0 %v458
  %482 = vmatprep.subr.bf16.mxu0 0
  %483 = vmatpush1.bf16.xpose.msra.mxu0 %v461
  %484 = vmatprep.subr.bf16.mxu0 0
  %485 = vmatpush1.bf16.xpose.msra.mxu0 %v464
  %486 = vmatprep.subr.bf16.mxu0 0
  %487 = vmatpush1.bf16.xpose.msra.mxu0 %v467
  %488 = vmatprep.subr.bf16.mxu0 0
  %489 = vmatpush1.bf16.xpose.msra.mxu0 %v470
  %490 = vmatprep.subr.bf16.mxu0 0
  %491 = vmatpush1.bf16.xpose.msra.mxu0 %v473
  %492 = vmatprep.subr.bf16.mxu0 0
  %493 = vmatpush1.bf16.xpose.msra.mxu0 %v476
  %494 = vmatprep.subr.bf16.mxu0 0
  %495 = vmatpush1.bf16.xpose.msra.mxu0 0
  %496 = vmatprep.subr.bf16.mxu0 0
  %497 = vmatpush1.bf16.xpose.msra.mxu0 0
  %498 = vmatprep.subr.bf16.mxu0 0
  %499 = vmatpush1.bf16.xpose.msra.mxu0 0
  %500 = vmatprep.subr.bf16.mxu0 0
  %501 = vmatpush1.bf16.xpose.msra.mxu0 0
  %502 = vmatprep.subr.bf16.mxu0 0
  %503 = vmatpush1.bf16.xpose.msra.mxu0 0
  %504 = vmatprep.subr.bf16.mxu0 0
  %505 = vmatpush1.bf16.xpose.msra.mxu0 0
  %506 = vmatprep.subr.bf16.mxu0 0
  %507 = vmatpush1.bf16.xpose.msra.mxu0 0
  %508 = vmatprep.subr.bf16.mxu0 0
  %509 = vmatpush1.bf16.xpose.msra.mxu0 0
  %510 = vmatprep.mubr.bf16.mxu0 0
  %511 = vmatmul.mubr.bf16.gmra.mrb[0].mxu0 %v452
  %v512 = vpop.f32.mrb[0].mxu0
  %v513 = vadd.f32 %v449, %v512
  %v514 = vpop.f32.mrb[0].mxu0
  %v515 = vpop.f32.mrb[0].mxu0
  %v516 = vpop.f32.mrb[0].mxu0
  %517 = vdwg.mxu0
  %518 = vst [vmem:[%s7] sm:$0x1] %v513
  // Predicated region
  $region30: #{mllinear_forward.1} parent=0 // pred_check
    _
  $region31: #{mllinear_forward.1} parent=0 // pred_check_branch
    %520 = sbr.rel (0) target = $region33
  $region32: #{mllinear_forward.1} parent=0 // pred_region
    _
  $region33: #{mllinear_forward.1} parent=0 // pred_fallthru
    _
  // Predicated region
  $region34: #{mllinear_forward.1} parent=0 // pred_check
    _
  $region35: #{mllinear_forward.1} parent=0 // pred_check_branch
    %522 = sbr.rel (0) target = $region37
  $region36: #{mllinear_forward.1} parent=0 // pred_region
    _
  $region37: #{mllinear_forward.1} parent=0 // pred_fallthru
    _

</llo_original>
